<compile_context>
chip_gen: v7x
topology: tpu7x:2x2x1
jax: 0.10.0
libtpu: 0.0.40
codegen_flags: <defaults>
</compile_context>

<pallas_src>
import jax
import jax.numpy as jnp
from jax.experimental import pallas as pl
from jax.experimental.pallas import tpu as pltpu

_LANE = 128  # lane width of a vreg (last dim)


def _round_up(x, m):
    return ((x + m - 1) // m) * m


def _linear_kernel(x_ref, w_ref, b_ref, o_ref):
    # x_ref: (TM, K) [maybe bf16], w_ref: (K, Npad) [maybe bf16],
    # b_ref: (1, Npad) f32, o_ref: (TM, Npad) f32.
    # MXU matmul with f32 accumulation, then f32 broadcast-add of the bias row.
    acc = jnp.dot(x_ref[...], w_ref[...], preferred_element_type=jnp.float32)
    o_ref[...] = (acc + b_ref[...]).astype(o_ref.dtype)


def prepare_label_classifier_params(weight, bias, *, use_bf16=True):
    """One-time parameter preparation (run at load time, NOT per forward call).

    Transposes the PyTorch-layout weight to [input_dim, num_classes], zero-pads
    the class dimension to a multiple of 128 lanes (lane-dense output), and
    optionally casts the weight to bf16 (memory-bound kernel -> halves weight
    HBM bytes and uses the native bf16 MXU path).  The bias row stays f32 so
    the epilogue add runs in f32 on the VPU (v5e has no bf16 VALU).
    """
    num_classes, input_dim = weight.shape
    n_pad = _round_up(num_classes, _LANE)
    w_dtype = jnp.bfloat16 if use_bf16 else weight.dtype
    w_t = (
        jnp.zeros((input_dim, n_pad), dtype=w_dtype)
        .at[:, :num_classes]
        .set(weight.T.astype(w_dtype))
    )
    b_row = (
        jnp.zeros((1, n_pad), dtype=jnp.float32)
        .at[0, :num_classes]
        .set(bias.astype(jnp.float32))
    )
    return w_t, b_row, num_classes


def _const_block_spec(shape):
    # Weight / bias blocks never change across grid steps (index_map -> (0,0)),
    # so a single VMEM buffer is enough; default double-buffering wastes VMEM.
    try:
        return pl.BlockSpec(shape, lambda i: (0, 0), pipeline_mode=pl.Buffered(1))
    except TypeError:  # very old jax without pipeline_mode: fall back cleanly
        return pl.BlockSpec(shape, lambda i: (0, 0))


def label_classifier_forward(x, w_t, b_row, num_classes, *, max_tm=512,
                             return_padded=False):
    """Pallas forward pass of LabelClassifier.

    Args:
      x:           [batch, input_dim] (f32 or bf16; cast to w_t.dtype here)
      w_t:         [input_dim, n_pad] pre-transposed, lane-padded weight
      b_row:       [1, n_pad] lane-padded f32 bias row
      num_classes: true (un-padded) number of classes
      max_tm:      max batch tile (multiple of 16); 512 keeps >=2 grid programs
                   for batch > 512 (v7x dual-TC) and ~85% of HBM roofline
      return_padded: skip the final column slice (consumer fuses it)
    Returns:
      [batch, num_classes] float32 (or [batch, n_pad] if return_padded)
    """
    batch, input_dim = x.shape
    k, n_pad = w_t.shape
    assert k == input_dim
    max_tm = max(16, _round_up(max_tm, 16))  # bf16-sublane friendly tile

    if x.dtype != w_t.dtype:
        x = x.astype(w_t.dtype)  # bf16 input path: halves x HBM bytes

    # Batch tile: whole batch in one tile when it fits (block dim == full array
    # dim is always legal), otherwise max_tm with a ragged last block that
    # Pallas masks.  No HBM-side re-pad of x (removed extra HBM pass).
    tm = batch if batch <= max_tm else max_tm
    grid = (pl.cdiv(batch, tm),)

    x_bytes = jnp.dtype(x.dtype).itemsize
    w_bytes = jnp.dtype(w_t.dtype).itemsize
    o_bytes = jnp.dtype(jnp.float32).itemsize

    out = pl.pallas_call(
        _linear_kernel,
        out_shape=jax.ShapeDtypeStruct((batch, n_pad), jnp.float32),
        grid=grid,
        in_specs=[
            pl.BlockSpec((tm, input_dim), lambda i: (i, 0)),
            # Weight / bias stay VMEM-resident (single buffer) across tiles.
            _const_block_spec((input_dim, n_pad)),
            _const_block_spec((1, n_pad)),
        ],
        out_specs=pl.BlockSpec((tm, n_pad), lambda i: (i, 0)),
        compiler_params=pltpu.CompilerParams(
            dimension_semantics=("parallel",),
        ),
        cost_estimate=pl.CostEstimate(
            flops=2 * batch * input_dim * n_pad,
            transcendentals=0,
            bytes_accessed=(
                batch * input_dim * x_bytes      # x
                + input_dim * n_pad * w_bytes    # weight
                + n_pad * 4                      # bias
                + batch * n_pad * o_bytes        # output
            ),
        ),
    )(x, w_t, b_row)

    if return_padded:
        return out
    # Column slice only (rows are exact).  For large batches prefer
    # return_padded=True and let the consumer fuse/skip this slice.
    return out[:, :num_classes]


def label_classifier_apply(x, w_t, b_row, num_classes, *, min_pallas_rows=128,
                           **kwargs):
    """Dispatcher: tiny batches skip the standalone pallas_call (pure overhead
    at M << MXU rows) and use a plain dot; larger batches use the kernel."""
    if x.shape[0] < min_pallas_rows:
        acc = jnp.dot(x.astype(w_t.dtype), w_t,
                      preferred_element_type=jnp.float32) + b_row
        return acc[:, :num_classes]
    return label_classifier_forward(x, w_t, b_row, num_classes, **kwargs)


if __name__ == "__main__":
    # Small shapes consistent with the module: LabelClassifier(input_dim=512,
    # num_classes=10) applied to a small batch of feature vectors.
    batch = 64
    input_dim = 512
    num_classes = 10

    key = jax.random.PRNGKey(0)
    kx, kw, kb = jax.random.split(key, 3)

    x = jax.random.normal(kx, (batch, input_dim), dtype=jnp.float32)

    # Deterministic init mimicking nn.Linear's uniform(-1/sqrt(in), 1/sqrt(in)).
    bound = 1.0 / jnp.sqrt(jnp.float32(input_dim))
    weight = jax.random.uniform(
        kw, (num_classes, input_dim), dtype=jnp.float32, minval=-bound, maxval=bound
    )
    bias = jax.random.uniform(
        kb, (num_classes,), dtype=jnp.float32, minval=-bound, maxval=bound
    )

    # One-time parameter prep (transpose + lane padding + bf16 cast), outside
    # the hot path.
    w_t, b_row, n_classes = prepare_label_classifier_params(weight, bias,
                                                            use_bf16=True)

    # Exercise the Pallas kernel path directly (label_classifier_apply would
    # bypass it at this tiny demo batch on purpose).
    out = label_classifier_forward(x, w_t, b_row, n_classes)
    out = jax.block_until_ready(out)

    # Reference check in plain JAX f32 (same math as torch's x @ W^T + b);
    # loose tolerance because the kernel inputs are bf16 (f32 accumulation).
    ref = x @ weight.T + bias
    assert out.shape == (batch, num_classes)
    assert jnp.allclose(out, ref, atol=5e-2, rtol=5e-2)

    print("KERNEL_OK")
</pallas_src>

<mosaic_0001>
module attributes {stable_mosaic.version = 11 : i64} {
  func.func @_linear_kernel(%arg0: i32, %arg1: memref<64x512xbf16, #tpu.memory_space<vmem>>, %arg2: memref<512x128xbf16, #tpu.memory_space<vmem>>, %arg3: memref<1x128xf32, #tpu.memory_space<vmem>>, %arg4: memref<64x128xf32, #tpu.memory_space<vmem>>) attributes {dimension_semantics = [#tpu.dimension_semantics<parallel>], iteration_bounds = array<i64: 1>, scalar_prefetch = 0 : i64, scratch_operands = 0 : i64, tpu.core_type = #tpu.core_type<tc>, window_params = [{transform_indices = @transform_0, window_bounds = array<i64: 64, 512>}, {pipeline_mode = #tpu.pipeline_mode<synchronous>, transform_indices = @transform_1, window_bounds = array<i64: 512, 128>}, {pipeline_mode = #tpu.pipeline_mode<synchronous>, transform_indices = @transform_2, window_bounds = array<i64: 1, 128>}, {transform_indices = @transform_3, window_bounds = array<i64: 64, 128>}]} {
    %c0 = arith.constant 0 : index
    %c0_0 = arith.constant 0 : index
    %0 = vector.load %arg1[%c0, %c0_0] : memref<64x512xbf16, #tpu.memory_space<vmem>>, vector<64x512xbf16>
    %c0_1 = arith.constant 0 : index
    %c0_2 = arith.constant 0 : index
    %1 = vector.load %arg2[%c0_1, %c0_2] : memref<512x128xbf16, #tpu.memory_space<vmem>>, vector<512x128xbf16>
    %cst = arith.constant dense<0.000000e+00> : vector<64x128xf32>
    %2 = tpu.matmul %0, %1, %cst {dimension_numbers = #tpu.dot_dimension_numbers<[1], [0], [0], [1], [0, 0, 1, 1], [], []>} : vector<64x512xbf16>, vector<512x128xbf16>, vector<64x128xf32> -> vector<64x128xf32>
    %c0_3 = arith.constant 0 : index
    %c0_4 = arith.constant 0 : index
    %3 = vector.load %arg3[%c0_3, %c0_4] : memref<1x128xf32, #tpu.memory_space<vmem>>, vector<1x128xf32>
    %4 = vector.broadcast %3 : vector<1x128xf32> to vector<64x128xf32>
    %5 = arith.addf %2, %4 : vector<64x128xf32>
    %c0_5 = arith.constant 0 : index
    %c0_6 = arith.constant 0 : index
    %6 = vector.load %arg4[%c0_5, %c0_6] : memref<64x128xf32, #tpu.memory_space<vmem>>, vector<64x128xf32>
    tpu.vector_store %arg4[%c0_5, %c0_6], %5 {strides = array<i32>} : memref<64x128xf32, #tpu.memory_space<vmem>>, vector<64x128xf32>,
    return
  }
  func.func @transform_0(%arg0: i32) -> (i32, i32) {
    %c0_i32 = arith.constant 0 : i32
    %c0_i32_0 = arith.constant 0 : i32
    return %arg0, %c0_i32 : i32, i32
  }
  func.func @transform_1(%arg0: i32) -> (i32, i32) {
    %c0_i32 = arith.constant 0 : i32
    %c0_i32_0 = arith.constant 0 : i32
    %c0_i32_1 = arith.constant 0 : i32
    return %c0_i32, %c0_i32_0 : i32, i32
  }
  func.func @transform_2(%arg0: i32) -> (i32, i32) {
    %c0_i32 = arith.constant 0 : i32
    %c0_i32_0 = arith.constant 0 : i32
    %c0_i32_1 = arith.constant 0 : i32
    return %c0_i32, %c0_i32_0 : i32, i32
  }
  func.func @transform_3(%arg0: i32) -> (i32, i32) {
    %c0_i32 = arith.constant 0 : i32
    %c0_i32_0 = arith.constant 0 : i32
    return %arg0, %c0_i32 : i32, i32
  }
}

</mosaic_0001>

<llo_original>
// kernel: tpu_custom_call.1
$region0: #{tpu_custom_call.1}
  #allocation0 [shape = 'u32[]', space=smem, size = 0x4, offset = 0x4, fixed_abs, tag = 'smem constant byte address 0x4 - core index']
  #allocation1 [shape = 'u32[144,128]{1,0:T(1,128)}', space=vmem, size = 0x12000, scoped, tag = 'internal scratch']
  %s0 = inlined_call_operand.hbm [shape: bf16[64,512], index: 0, kind: input, shape index: {}]
  %s1 = inlined_call_operand.hbm [shape: bf16[512,128], index: 1, kind: input, shape index: {}]
  %s2 = inlined_call_operand.vmem [shape: f32[1,128], index: 2, kind: input, shape index: {}]
  %s3 = inlined_call_operand.hbm [shape: f32[64,128], index: 3, kind: output, shape index: {}]
  %s4 = sld [smem:[#allocation0]]
  $region30: #{tpu_custom_call.1} parent=0
    _
  %s6 = ssub.s32 1, %s4
  %s7 = scalar_select 0, %s6, %s4
  $region1: #{tpu_custom_call.1} parent=0
    #allocation2 [shape = 'u8[65536]{0}', space=vmem, size = 0x10000, scoped, tag = 'input window, operand 0, single buffered']
    #allocation3 [shape = 's32[1]{0}', space=sflag, size = 0x4, scoped, tag = 'scoped memory for tpu_custom_call.1']
    #allocation4 [shape = 's32[1]{0}', space=sflag, size = 0x4, scoped, tag = 'scoped memory for tpu_custom_call.1']
    #allocation5 [shape = 'u8[131072]{0}', space=vmem, size = 0x20000, scoped, tag = 'input window, operand 1, single buffered']
    #allocation6 [shape = 's32[1]{0}', space=sflag, size = 0x4, scoped, tag = 'scoped memory for tpu_custom_call.1']
    #allocation7 [shape = 'u8[32768]{0}', space=vmem, size = 0x8000, scoped, tag = 'output window, operand 0, single buffered']
    %8 = vsyncpa [#allocation3], 0
    %9 = vsyncpa [#allocation6], 0
    %10 = vsyncpa [#allocation4], 0
    // Predicated region
    $region2: #{tpu_custom_call.1} parent=1 // pred_check
      _
    $region3: #{tpu_custom_call.1} parent=1 // pred_check_branch
      %12 = sbr.rel (0) target = $region5
    $region4: #{tpu_custom_call.1} parent=1 // pred_region
      %s14 = ssub.s32 2048, 2048
      %15 = vsyncadd [#allocation3], %s14
      %s16 = sshll.u32 [#allocation2], 4
      %s17 = int_to_ptr.vmem [resolvable:$true] %s16
      %22 = dma.hbm_to_vmem [thread:$0]  %s0, 2048, %s17, [#allocation3], 256, 256, 16
    $region5: #{tpu_custom_call.1} parent=1 // pred_fallthru
      _
    // Predicated region
    $region6: #{tpu_custom_call.1} parent=1 // pred_check
      _
    $region7: #{tpu_custom_call.1} parent=1 // pred_check_branch
      %24 = sbr.rel (0) target = $region9
    $region8: #{tpu_custom_call.1} parent=1 // pred_region
      %s26 = ssub.s32 4096, 4096
      %27 = vsyncadd [#allocation6], %s26
      %s28 = sshll.u32 [#allocation5], 4
      %s29 = int_to_ptr.vmem [resolvable:$true] %s28
      %34 = dma.hbm_to_vmem [thread:$0]  %s1, 4096, %s29, [#allocation6], 64, 64, 4
    $region9: #{tpu_custom_call.1} parent=1 // pred_fallthru
      _
    // Predicated region
    $region10: #{tpu_custom_call.1} parent=1 // pred_check
      _
    $region11: #{tpu_custom_call.1} parent=1 // pred_check_branch
      %36 = sbr.rel (0) target = $region13
    $region12: #{tpu_custom_call.1} parent=1 // pred_region
      _
    $region13: #{tpu_custom_call.1} parent=1 // pred_fallthru
      _
    // Predicated region
    $region14: #{tpu_custom_call.1} parent=1 // pred_check
      _
    $region15: #{tpu_custom_call.1} parent=1 // pred_check_branch
      %38 = sbr.rel (0) target = $region17
    $region16: #{tpu_custom_call.1} parent=1 // pred_region
      %39 = dma.done [#allocation3], 2048
    $region17: #{tpu_custom_call.1} parent=1 // pred_fallthru
      _
    // Predicated region
    $region18: #{tpu_custom_call.1} parent=1 // pred_check
      _
    $region19: #{tpu_custom_call.1} parent=1 // pred_check_branch
      %41 = sbr.rel (0) target = $region21
    $region20: #{tpu_custom_call.1} parent=1 // pred_region
      %42 = dma.done [#allocation6], 4096
    $region21: #{tpu_custom_call.1} parent=1 // pred_fallthru
      _
    %v44 = vld [vmem:[#allocation2] sm:$0xff]
    %v45 = vld [vmem:[#allocation2 + $0x8] sm:$0xff]
    %v46 = vld [vmem:[#allocation2 + $0x10] sm:$0xff]
    %v47 = vld [vmem:[#allocation2 + $0x18] sm:$0xff]
    %v48 = vld [vmem:[#allocation2 + $0x20] sm:$0xff]
    %v49 = vld [vmem:[#allocation2 + $0x28] sm:$0xff]
    %v50 = vld [vmem:[#allocation2 + $0x30] sm:$0xff]
    %v51 = vld [vmem:[#allocation2 + $0x38] sm:$0xff]
    %v52 = vld [vmem:[#allocation2 + $0x40] sm:$0xff]
    %v53 = vld [vmem:[#allocation2 + $0x48] sm:$0xff]
    %v54 = vld [vmem:[#allocation2 + $0x50] sm:$0xff]
    %v55 = vld [vmem:[#allocation2 + $0x58] sm:$0xff]
    %v56 = vld [vmem:[#allocation2 + $0x60] sm:$0xff]
    %v57 = vld [vmem:[#allocation2 + $0x68] sm:$0xff]
    %v58 = vld [vmem:[#allocation2 + $0x70] sm:$0xff]
    %v59 = vld [vmem:[#allocation2 + $0x78] sm:$0xff]
    %v60 = vld [vmem:[#allocation5] sm:$0xf]
    %v61 = vld [vmem:[#allocation5 + $0x4] sm:$0xf]
    %v62 = vld [vmem:[#allocation5 + $0x8] sm:$0xf]
    %v63 = vld [vmem:[#allocation5 + $0xc] sm:$0xf]
    %v64 = vld [vmem:[#allocation5 + $0x10] sm:$0xf]
    %v65 = vld [vmem:[#allocation5 + $0x14] sm:$0xf]
    %v66 = vld [vmem:[#allocation5 + $0x18] sm:$0xf]
    %v67 = vld [vmem:[#allocation5 + $0x1c] sm:$0xf]
    %v68 = vld [vmem:[#allocation5 + $0x20] sm:$0xf]
    %v69 = vld [vmem:[#allocation5 + $0x24] sm:$0xf]
    %v70 = vld [vmem:[#allocation5 + $0x28] sm:$0xf]
    %v71 = vld [vmem:[#allocation5 + $0x2c] sm:$0xf]
    %v72 = vld [vmem:[#allocation5 + $0x30] sm:$0xf]
    %v73 = vld [vmem:[#allocation5 + $0x34] sm:$0xf]
    %v74 = vld [vmem:[#allocation5 + $0x38] sm:$0xf]
    %v75 = vld [vmem:[#allocation5 + $0x3c] sm:$0xf]
    %v76 = vld [vmem:[#allocation5 + $0x40] sm:$0xf]
    %v77 = vld [vmem:[#allocation5 + $0x44] sm:$0xf]
    %v78 = vld [vmem:[#allocation5 + $0x48] sm:$0xf]
    %v79 = vld [vmem:[#allocation5 + $0x4c] sm:$0xf]
    %v80 = vld [vmem:[#allocation5 + $0x50] sm:$0xf]
    %v81 = vld [vmem:[#allocation5 + $0x54] sm:$0xf]
    %v82 = vld [vmem:[#allocation5 + $0x58] sm:$0xf]
    %v83 = vld [vmem:[#allocation5 + $0x5c] sm:$0xf]
    %v84 = vld [vmem:[#allocation5 + $0x60] sm:$0xf]
    %v85 = vld [vmem:[#allocation5 + $0x64] sm:$0xf]
    %v86 = vld [vmem:[#allocation5 + $0x68] sm:$0xf]
    %v87 = vld [vmem:[#allocation5 + $0x6c] sm:$0xf]
    %v88 = vld [vmem:[#allocation5 + $0x70] sm:$0xf]
    %v89 = vld [vmem:[#allocation5 + $0x74] sm:$0xf]
    %v90 = vld [vmem:[#allocation5 + $0x78] sm:$0xf]
    %v91 = vld [vmem:[#allocation5 + $0x7c] sm:$0xf]
    %v92 = vld [vmem:[#allocation5 + $0x80] sm:$0xf]
    %v93 = vld [vmem:[#allocation5 + $0x84] sm:$0xf]
    %v94 = vld [vmem:[#allocation5 + $0x88] sm:$0xf]
    %v95 = vld [vmem:[#allocation5 + $0x8c] sm:$0xf]
    %v96 = vld [vmem:[#allocation5 + $0x90] sm:$0xf]
    %v97 = vld [vmem:[#allocation5 + $0x94] sm:$0xf]
    %v98 = vld [vmem:[#allocation5 + $0x98] sm:$0xf]
    %v99 = vld [vmem:[#allocation5 + $0x9c] sm:$0xf]
    %v100 = vld [vmem:[#allocation5 + $0xa0] sm:$0xf]
    %v101 = vld [vmem:[#allocation5 + $0xa4] sm:$0xf]
    %v102 = vld [vmem:[#allocation5 + $0xa8] sm:$0xf]
    %v103 = vld [vmem:[#allocation5 + $0xac] sm:$0xf]
    %v104 = vld [vmem:[#allocation5 + $0xb0] sm:$0xf]
    %v105 = vld [vmem:[#allocation5 + $0xb4] sm:$0xf]
    %v106 = vld [vmem:[#allocation5 + $0xb8] sm:$0xf]
    %v107 = vld [vmem:[#allocation5 + $0xbc] sm:$0xf]
    %v108 = vld [vmem:[#allocation5 + $0xc0] sm:$0xf]
    %v109 = vld [vmem:[#allocation5 + $0xc4] sm:$0xf]
    %v110 = vld [vmem:[#allocation5 + $0xc8] sm:$0xf]
    %v111 = vld [vmem:[#allocation5 + $0xcc] sm:$0xf]
    %v112 = vld [vmem:[#allocation5 + $0xd0] sm:$0xf]
    %v113 = vld [vmem:[#allocation5 + $0xd4] sm:$0xf]
    %v114 = vld [vmem:[#allocation5 + $0xd8] sm:$0xf]
    %v115 = vld [vmem:[#allocation5 + $0xdc] sm:$0xf]
    %v116 = vld [vmem:[#allocation5 + $0xe0] sm:$0xf]
    %v117 = vld [vmem:[#allocation5 + $0xe4] sm:$0xf]
    %v118 = vld [vmem:[#allocation5 + $0xe8] sm:$0xf]
    %v119 = vld [vmem:[#allocation5 + $0xec] sm:$0xf]
    %v120 = vld [vmem:[#allocation5 + $0xf0] sm:$0xf]
    %v121 = vld [vmem:[#allocation5 + $0xf4] sm:$0xf]
    %v122 = vld [vmem:[#allocation5 + $0xf8] sm:$0xf]
    %v123 = vld [vmem:[#allocation5 + $0xfc] sm:$0xf]
    %v124 = vld [vmem:[%s2] sm:$0x1]
    %v126 = vlaneseq
    %v127 = vshrl.u32 %v126, 7
    %v128 = vsub.s32 0, %v127
    %v129 = vrot.slane %v124, %v128
    %v147 = vunpack.c.l.b16 %v44
    %v148 = vunpack.c.h.b16 %v44
    %v149 = vunpack.c.l.b16 %v45
    %v150 = vunpack.c.h.b16 %v45
    %v151 = vunpack.c.l.b16 %v46
    %v152 = vunpack.c.h.b16 %v46
    %v153 = vunpack.c.l.b16 %v47
    %v154 = vunpack.c.h.b16 %v47
    %v155 = vunpack.c.l.b16 %v48
    %v156 = vunpack.c.h.b16 %v48
    %v157 = vunpack.c.l.b16 %v49
    %v158 = vunpack.c.h.b16 %v49
    %v159 = vunpack.c.l.b16 %v50
    %v160 = vunpack.c.h.b16 %v50
    %v161 = vunpack.c.l.b16 %v51
    %v162 = vunpack.c.h.b16 %v51
    %v163 = vunpack.c.l.b16 %v52
    %v164 = vunpack.c.h.b16 %v52
    %v165 = vunpack.c.l.b16 %v53
    %v166 = vunpack.c.h.b16 %v53
    %v167 = vunpack.c.l.b16 %v54
    %v168 = vunpack.c.h.b16 %v54
    %v169 = vunpack.c.l.b16 %v55
    %v170 = vunpack.c.h.b16 %v55
    %v171 = vunpack.c.l.b16 %v56
    %v172 = vunpack.c.h.b16 %v56
    %v173 = vunpack.c.l.b16 %v57
    %v174 = vunpack.c.h.b16 %v57
    %v175 = vunpack.c.l.b16 %v58
    %v176 = vunpack.c.h.b16 %v58
    %v177 = vunpack.c.l.b16 %v59
    %v178 = vunpack.c.h.b16 %v59
    %v179 = vpack.c.b16 %v151, %v147
    %v180 = vpack.c.b16 %v152, %v148
    %v181 = vpack.c.b16 %v153, %v149
    %v182 = vpack.c.b16 %v154, %v150
    %v183 = vpack.c.b16 %v159, %v155
    %v184 = vpack.c.b16 %v160, %v156
    %v185 = vpack.c.b16 %v161, %v157
    %v186 = vpack.c.b16 %v162, %v158
    %v187 = vpack.c.b16 %v167, %v163
    %v188 = vpack.c.b16 %v168, %v164
    %v189 = vpack.c.b16 %v169, %v165
    %v190 = vpack.c.b16 %v170, %v166
    %v191 = vpack.c.b16 %v175, %v171
    %v192 = vpack.c.b16 %v176, %v172
    %v193 = vpack.c.b16 %v177, %v173
    %v194 = vpack.c.b16 %v178, %v174
    %v275 = vunpack.c.l.b16 %v60
    %v276 = vunpack.c.l.b16 %v61
    %v277 = vunpack.c.l.b16 %v62
    %v278 = vunpack.c.l.b16 %v63
    %v279 = vunpack.c.l.b16 %v64
    %v280 = vunpack.c.l.b16 %v65
    %v281 = vunpack.c.l.b16 %v66
    %v282 = vunpack.c.l.b16 %v67
    %v283 = vunpack.c.l.b16 %v68
    %v284 = vunpack.c.l.b16 %v69
    %v285 = vunpack.c.l.b16 %v70
    %v286 = vunpack.c.l.b16 %v71
    %v287 = vunpack.c.l.b16 %v72
    %v288 = vunpack.c.l.b16 %v73
    %v289 = vunpack.c.l.b16 %v74
    %v290 = vunpack.c.l.b16 %v75
    %v291 = vunpack.c.l.b16 %v76
    %v292 = vunpack.c.l.b16 %v77
    %v293 = vunpack.c.l.b16 %v78
    %v294 = vunpack.c.l.b16 %v79
    %v295 = vunpack.c.l.b16 %v80
    %v296 = vunpack.c.l.b16 %v81
    %v297 = vunpack.c.l.b16 %v82
    %v298 = vunpack.c.l.b16 %v83
    %v299 = vunpack.c.l.b16 %v84
    %v300 = vunpack.c.l.b16 %v85
    %v301 = vunpack.c.l.b16 %v86
    %v302 = vunpack.c.l.b16 %v87
    %v303 = vunpack.c.l.b16 %v88
    %v304 = vunpack.c.l.b16 %v89
    %v305 = vunpack.c.l.b16 %v90
    %v306 = vunpack.c.l.b16 %v91
    %v307 = vunpack.c.l.b16 %v92
    %v308 = vunpack.c.l.b16 %v93
    %v309 = vunpack.c.l.b16 %v94
    %v310 = vunpack.c.l.b16 %v95
    %v311 = vunpack.c.l.b16 %v96
    %v312 = vunpack.c.l.b16 %v97
    %v313 = vunpack.c.l.b16 %v98
    %v314 = vunpack.c.l.b16 %v99
    %v315 = vunpack.c.l.b16 %v100
    %v316 = vunpack.c.l.b16 %v101
    %v317 = vunpack.c.l.b16 %v102
    %v318 = vunpack.c.l.b16 %v103
    %v319 = vunpack.c.l.b16 %v104
    %v320 = vunpack.c.l.b16 %v105
    %v321 = vunpack.c.l.b16 %v106
    %v322 = vunpack.c.l.b16 %v107
    %v323 = vunpack.c.l.b16 %v108
    %v324 = vunpack.c.l.b16 %v109
    %v325 = vunpack.c.l.b16 %v110
    %v326 = vunpack.c.l.b16 %v111
    %v327 = vunpack.c.l.b16 %v112
    %v328 = vunpack.c.l.b16 %v113
    %v329 = vunpack.c.l.b16 %v114
    %v330 = vunpack.c.l.b16 %v115
    %v331 = vunpack.c.l.b16 %v116
    %v332 = vunpack.c.l.b16 %v117
    %v333 = vunpack.c.l.b16 %v118
    %v334 = vunpack.c.l.b16 %v119
    %v335 = vunpack.c.l.b16 %v120
    %v336 = vunpack.c.l.b16 %v121
    %v337 = vunpack.c.l.b16 %v122
    %v338 = vunpack.c.l.b16 %v123
    %v339 = vpack.c.b16 %v276, %v275
    %v340 = vpack.c.b16 %v278, %v277
    %v341 = vpack.c.b16 %v280, %v279
    %v342 = vpack.c.b16 %v282, %v281
    %v343 = vpack.c.b16 %v284, %v283
    %v344 = vpack.c.b16 %v286, %v285
    %v345 = vpack.c.b16 %v288, %v287
    %v346 = vpack.c.b16 %v290, %v289
    %v347 = vpack.c.b16 %v292, %v291
    %v348 = vpack.c.b16 %v294, %v293
    %v349 = vpack.c.b16 %v296, %v295
    %v350 = vpack.c.b16 %v298, %v297
    %v351 = vpack.c.b16 %v300, %v299
    %v352 = vpack.c.b16 %v302, %v301
    %v353 = vpack.c.b16 %v304, %v303
    %v354 = vpack.c.b16 %v306, %v305
    %v355 = vpack.c.b16 %v308, %v307
    %v356 = vpack.c.b16 %v310, %v309
    %v357 = vpack.c.b16 %v312, %v311
    %v358 = vpack.c.b16 %v314, %v313
    %v359 = vpack.c.b16 %v316, %v315
    %v360 = vpack.c.b16 %v318, %v317
    %v361 = vpack.c.b16 %v320, %v319
    %v362 = vpack.c.b16 %v322, %v321
    %v363 = vpack.c.b16 %v324, %v323
    %v364 = vpack.c.b16 %v326, %v325
    %v365 = vpack.c.b16 %v328, %v327
    %v366 = vpack.c.b16 %v330, %v329
    %v367 = vpack.c.b16 %v332, %v331
    %v368 = vpack.c.b16 %v334, %v333
    %v369 = vpack.c.b16 %v336, %v335
    %v370 = vpack.c.b16 %v338, %v337
    %403 = vmatprep.subr.bf16.mxu0 0
    %404 = vmatpush1.bf16.msra.mxu0 %v339
    %405 = vmatprep.subr.bf16.mxu0 0
    %406 = vmatpush1.bf16.msra.mxu0 %v340
    %407 = vmatprep.subr.bf16.mxu0 0
    %408 = vmatpush1.bf16.msra.mxu0 %v341
    %409 = vmatprep.subr.bf16.mxu0 0
    %410 = vmatpush1.bf16.msra.mxu0 %v342
    %411 = vmatprep.subr.bf16.mxu0 0
    %412 = vmatpush1.bf16.msra.mxu0 %v343
    %413 = vmatprep.subr.bf16.mxu0 0
    %414 = vmatpush1.bf16.msra.mxu0 %v344
    %415 = vmatprep.subr.bf16.mxu0 0
    %416 = vmatpush1.bf16.msra.mxu0 %v345
    %417 = vmatprep.subr.bf16.mxu0 0
    %418 = vmatpush1.bf16.msra.mxu0 %v346
    %419 = vmatprep.subr.bf16.mxu0 0
    %420 = vmatpush1.bf16.msra.mxu0 %v347
    %421 = vmatprep.subr.bf16.mxu0 0
    %422 = vmatpush1.bf16.msra.mxu0 %v348
    %423 = vmatprep.subr.bf16.mxu0 0
    %424 = vmatpush1.bf16.msra.mxu0 %v349
    %425 = vmatprep.subr.bf16.mxu0 0
    %426 = vmatpush1.bf16.msra.mxu0 %v350
    %427 = vmatprep.subr.bf16.mxu0 0
    %428 = vmatpush1.bf16.msra.mxu0 %v351
    %429 = vmatprep.subr.bf16.mxu0 0
    %430 = vmatpush1.bf16.msra.mxu0 %v352
    %431 = vmatprep.subr.bf16.mxu0 0
    %432 = vmatpush1.bf16.msra.mxu0 %v353
    %433 = vmatprep.subr.bf16.mxu0 0
    %434 = vmatpush1.bf16.msra.mxu0 %v354
    %435 = vmatprep.mubr.bf16.mxu0 %v180
    %436 = vmatmul.mubr.bf16.gmra.mrb[0].mxu0 %v179
    %v437 = vpop.f32.mrb[0].mxu0
    %v438 = vadd.f32 %v129, %v437
    %v439 = vpop.f32.mrb[0].mxu0
    %v440 = vpop.f32.mrb[0].mxu0
    %v441 = vadd.f32 %v129, %v440
    %v442 = vpop.f32.mrb[0].mxu0
    %443 = vmatprep.mubr.bf16.mxu0 %v184
    %444 = vmatmul.mubr.bf16.gmra.mrb[0].mxu0 %v183
    %v445 = vpop.f32.mrb[0].mxu0
    %v446 = vadd.f32 %v129, %v445
    %v447 = vpop.f32.mrb[0].mxu0
    %v448 = vpop.f32.mrb[0].mxu0
    %v449 = vadd.f32 %v129, %v448
    %v450 = vpop.f32.mrb[0].mxu0
    %451 = vmatprep.mubr.bf16.mxu0 %v188
    %452 = vmatmul.mubr.bf16.gmra.mrb[0].mxu0 %v187
    %v453 = vpop.f32.mrb[0].mxu0
    %v454 = vadd.f32 %v129, %v453
    %v455 = vpop.f32.mrb[0].mxu0
    %v456 = vpop.f32.mrb[0].mxu0
    %v457 = vadd.f32 %v129, %v456
    %v458 = vpop.f32.mrb[0].mxu0
    %459 = vmatprep.mubr.bf16.mxu0 %v192
    %460 = vmatmul.mubr.bf16.gmra.mrb[0].mxu0 %v191
    %v461 = vpop.f32.mrb[0].mxu0
    %v462 = vadd.f32 %v129, %v461
    %v463 = vpop.f32.mrb[0].mxu0
    %v464 = vpop.f32.mrb[0].mxu0
    %v465 = vadd.f32 %v129, %v464
    %v466 = vpop.f32.mrb[0].mxu0
    %467 = vdwg.mxu0
    %468 = vmatprep.subr.bf16.mxu0 0
    %469 = vmatpush1.bf16.msra.mxu0 %v355
    %470 = vmatprep.subr.bf16.mxu0 0
    %471 = vmatpush1.bf16.msra.mxu0 %v356
    %472 = vmatprep.subr.bf16.mxu0 0
    %473 = vmatpush1.bf16.msra.mxu0 %v357
    %474 = vmatprep.subr.bf16.mxu0 0
    %475 = vmatpush1.bf16.msra.mxu0 %v358
    %476 = vmatprep.subr.bf16.mxu0 0
    %477 = vmatpush1.bf16.msra.mxu0 %v359
    %478 = vmatprep.subr.bf16.mxu0 0
    %479 = vmatpush1.bf16.msra.mxu0 %v360
    %480 = vmatprep.subr.bf16.mxu0 0
    %481 = vmatpush1.bf16.msra.mxu0 %v361
    %482 = vmatprep.subr.bf16.mxu0 0
    %483 = vmatpush1.bf16.msra.mxu0 %v362
    %484 = vmatprep.subr.bf16.mxu0 0
    %485 = vmatpush1.bf16.msra.mxu0 %v363
    %486 = vmatprep.subr.bf16.mxu0 0
    %487 = vmatpush1.bf16.msra.mxu0 %v364
    %488 = vmatprep.subr.bf16.mxu0 0
    %489 = vmatpush1.bf16.msra.mxu0 %v365
    %490 = vmatprep.subr.bf16.mxu0 0
    %491 = vmatpush1.bf16.msra.mxu0 %v366
    %492 = vmatprep.subr.bf16.mxu0 0
    %493 = vmatpush1.bf16.msra.mxu0 %v367
    %494 = vmatprep.subr.bf16.mxu0 0
    %495 = vmatpush1.bf16.msra.mxu0 %v368
    %496 = vmatprep.subr.bf16.mxu0 0
    %497 = vmatpush1.bf16.msra.mxu0 %v369
    %498 = vmatprep.subr.bf16.mxu0 0
    %499 = vmatpush1.bf16.msra.mxu0 %v370
    %500 = vmatprep.mubr.bf16.mxu0 %v182
    %501 = vmatmul.mubr.bf16.gmra.mrb[0].mxu0 %v181
    %v502 = vpop.f32.mrb[0].mxu0
    %v503 = vadd.f32 %v438, %v502
    %v504 = vpop.f32.mrb[0].mxu0
    %v505 = vpop.f32.mrb[0].mxu0
    %v506 = vadd.f32 %v441, %v505
    %v507 = vpop.f32.mrb[0].mxu0
    %508 = vmatprep.mubr.bf16.mxu0 %v186
    %509 = vmatmul.mubr.bf16.gmra.mrb[0].mxu0 %v185
    %v510 = vpop.f32.mrb[0].mxu0
    %v511 = vadd.f32 %v446, %v510
    %v512 = vpop.f32.mrb[0].mxu0
    %v513 = vpop.f32.mrb[0].mxu0
    %v514 = vadd.f32 %v449, %v513
    %v515 = vpop.f32.mrb[0].mxu0
    %516 = vmatprep.mubr.bf16.mxu0 %v190
    %517 = vmatmul.mubr.bf16.gmra.mrb[0].mxu0 %v189
    %v518 = vpop.f32.mrb[0].mxu0
    %v519 = vadd.f32 %v454, %v518
    %v520 = vpop.f32.mrb[0].mxu0
    %v521 = vpop.f32.mrb[0].mxu0
    %v522 = vadd.f32 %v457, %v521
    %v523 = vpop.f32.mrb[0].mxu0
    %524 = vmatprep.mubr.bf16.mxu0 %v194
    %525 = vmatmul.mubr.bf16.gmra.mrb[0].mxu0 %v193
    %v526 = vpop.f32.mrb[0].mxu0
    %v527 = vadd.f32 %v462, %v526
    %v528 = vpop.f32.mrb[0].mxu0
    %v529 = vpop.f32.mrb[0].mxu0
    %v530 = vadd.f32 %v465, %v529
    %v531 = vpop.f32.mrb[0].mxu0
    %532 = vdwg.mxu0
    %533 = vst [vmem:[#allocation7] sm:$0xff] %v503
    %534 = vst [vmem:[#allocation7 + $0x8] sm:$0xff] %v506
    %535 = vst [vmem:[#allocation7 + $0x10] sm:$0xff] %v511
    %536 = vst [vmem:[#allocation7 + $0x18] sm:$0xff] %v514
    %537 = vst [vmem:[#allocation7 + $0x20] sm:$0xff] %v519
    %538 = vst [vmem:[#allocation7 + $0x28] sm:$0xff] %v522
    %539 = vst [vmem:[#allocation7 + $0x30] sm:$0xff] %v527
    %540 = vst [vmem:[#allocation7 + $0x38] sm:$0xff] %v530
    // Predicated region
    $region22: #{tpu_custom_call.1} parent=1 // pred_check
      _
    $region23: #{tpu_custom_call.1} parent=1 // pred_check_branch
      %542 = sbr.rel (0) target = $region25
    $region24: #{tpu_custom_call.1} parent=1 // pred_region
      %s544 = ssub.s32 1024, 1024
      %545 = vsyncadd [#allocation4], %s544
      %s546 = sshll.u32 [#allocation7], 4
      %s547 = int_to_ptr.vmem [resolvable:$true] %s546
      %552 = dma.vmem_to_hbm [thread:$0]  %s547, 1024, %s3, [#allocation4], 128, 128, 8
    $region25: #{tpu_custom_call.1} parent=1 // pred_fallthru
      _
    // Predicated region
    $region26: #{tpu_custom_call.1} parent=1 // pred_check
      _
    $region27: #{tpu_custom_call.1} parent=1 // pred_check_branch
      %554 = sbr.rel (0) target = $region29
    $region28: #{tpu_custom_call.1} parent=1 // pred_region
      %555 = dma.done [#allocation4], 1024
    $region29: #{tpu_custom_call.1} parent=1 // pred_fallthru
      _
    %556 = vsyncpa [#allocation3], 1
    %557 = vsyncpa [#allocation6], 1
    %558 = vsyncpa [#allocation4], 1

</llo_original>
